<compile_context>
chip_gen: v5e
topology: v5e:2x2
jax: 0.10.0
libtpu: 0.0.40
codegen_flags: <defaults>
</compile_context>

<pallas_src>
import functools

import numpy as np
import jax
import jax.numpy as jnp
from jax.experimental import pallas as pl
from jax.experimental.pallas import tpu as pltpu


# ---------------------------------------------------------------------------
# Host-side (deterministic) parameter construction
# ---------------------------------------------------------------------------
def _gaussian_1d(window_size: int, sigma: float) -> np.ndarray:
    # matches kornia.filters.get_gaussian_kernel1d
    x = np.arange(window_size, dtype=np.float64) - window_size // 2
    if window_size % 2 == 0:
        x = x + 0.5
    g = np.exp(-(x ** 2) / (2.0 * sigma ** 2))
    return (g / g.sum()).astype(np.float32)


def _reflect_conv_matrix(n: int, g: np.ndarray) -> np.ndarray:
    """Dense matrix A (n, n) with A @ v == 'same' filtering of v by g using
    reflect (no edge repeat) padding (kornia.filters.filter2d behaviour)."""
    k = g.shape[0]
    pad = (k - 1) // 2
    a = np.zeros((n, n), dtype=np.float32)
    for o in range(n):
        for t in range(k):
            i = o + t - pad
            if i < 0:
                i = -i
            elif i >= n:
                i = 2 * n - 2 - i
            a[o, i] += g[t]
    return a


# ---------------------------------------------------------------------------
# Pallas kernel: one packed (R, Ccols) slab of image pairs per grid step
# ---------------------------------------------------------------------------
def _combined_loss_kernel(x_ref, y_ref, w_ref, ah_ref, awt_ref, out_ref, *,
                          alpha, c1, c2, eps, fuse_rows):
    x = x_ref[...]                      # (R, Cc): tbc_h*tbc_w images packed 2D
    y = y_ref[...]
    wmap = w_ref[...]                   # (R, Cc): per-pixel folded weights
    ah = ah_ref[...]                    # row (H-axis) reflect filter, block-diag
    awt = awt_ref[...]                  # (Cc, Cc): I_tbc_w (x) A_w^T
    r = x.shape[0]

    # fused 9x9 separable Gaussian filtering of the five SSIM maps
    z5 = jnp.concatenate([x, y, x * x, y * y, x * y], axis=0)        # (5R, Cc)
    f1 = jnp.dot(z5, awt, preferred_element_type=jnp.float32)        # col filter

    if fuse_rows:
        # one row-filter matmul with I_{5*tbc_h} (x) A_h  (5R <= 128)
        mu = jnp.dot(ah, f1, preferred_element_type=jnp.float32)     # (5R, Cc)
        mu_x = mu[0 * r:1 * r]
        mu_y = mu[1 * r:2 * r]
        mu_xx = mu[2 * r:3 * r]
        mu_yy = mu[3 * r:4 * r]
        mu_xy = mu[4 * r:5 * r]
    else:
        # per-map row filter with I_tbc_h (x) A_h (avoids 5x zero FLOPs)
        mu_x = jnp.dot(ah, f1[0 * r:1 * r], preferred_element_type=jnp.float32)
        mu_y = jnp.dot(ah, f1[1 * r:2 * r], preferred_element_type=jnp.float32)
        mu_xx = jnp.dot(ah, f1[2 * r:3 * r], preferred_element_type=jnp.float32)
        mu_yy = jnp.dot(ah, f1[3 * r:4 * r], preferred_element_type=jnp.float32)
        mu_xy = jnp.dot(ah, f1[4 * r:5 * r], preferred_element_type=jnp.float32)

    sigma_x = mu_xx - mu_x * mu_x
    sigma_y = mu_yy - mu_y * mu_y
    sigma_xy = mu_xy - mu_x * mu_y

    num = (2.0 * mu_x * mu_y + c1) * (2.0 * sigma_xy + c2)
    den = (mu_x * mu_x + mu_y * mu_y + c1) * (sigma_x + sigma_y + c2)
    # kornia.losses.SSIMLoss(reduction='none'): clamp((1 - ssim) / 2, 0, 1)
    ssim_loss = jnp.clip(0.5 * (1.0 - num / (den + eps)), 0.0, 1.0)

    l1_map = jnp.abs(x - y)                                          # L1(reduction='none')
    combined = (1.0 - alpha) * l1_map + alpha * ssim_loss            # (R, Cc)

    # weighted reduction: wmap already folds the per-channel discount, the
    # batch mean (1/B), the spatial mean (1/(H*W)) and zeros for padding.
    s = jnp.sum(combined * wmap, axis=1, keepdims=True)              # (R, 1)
    s = jnp.sum(s, axis=0, keepdims=True)                            # (1, 1)
    out_ref[0] = jnp.broadcast_to(s, (8, 128)).astype(out_ref.dtype)


# ---------------------------------------------------------------------------
# Wrapper
# ---------------------------------------------------------------------------
def combined_loss_discounted(x, y, *, alpha=0.5, window_size=9, gamma=0.9):
    assert x.shape == y.shape and x.ndim == 4
    b, c, h, w = map(int, x.shape)
    n_img = b * c

    # lane packing: tbc_w images side-by-side along the 128-lane axis
    tbc_w = 1 if w >= 128 else min(n_img, max(1, 128 // w))
    ccols = tbc_w * w
    groups = -(-n_img // tbc_w)

    # sublane packing: tbc_h lane-groups per grid step (~128 rows), 8-aligned
    tbc_h = max(1, min(groups, max(1, 128 // h)))
    while tbc_h > 1 and (tbc_h * h) % 8 != 0:
        tbc_h -= 1
    if (tbc_h * h) % 8 != 0:        # H not a multiple of 8 -> one full tile
        tbc_h = groups
    n_tiles = -(-groups // tbc_h)
    groups_pad = n_tiles * tbc_h
    rrows = tbc_h * h
    n_pad_img = groups_pad * tbc_w

    # constant filter matrices (host, deterministic)
    g = _gaussian_1d(window_size, 1.5)
    a_h = _reflect_conv_matrix(h, g)
    a_w = _reflect_conv_matrix(w, g)
    awt = np.kron(np.eye(tbc_w, dtype=np.float32), a_w.T).astype(np.float32)
    fuse_rows = (5 * rrows) <= 128
    reps = 5 * tbc_h if fuse_rows else tbc_h
    ah = np.kron(np.eye(reps, dtype=np.float32), a_h).astype(np.float32)

    # per-image weights: channel discount (gamma^i, i=1..C, normalized),
    # batch mean (1/B) and spatial mean (1/(H*W)) folded; zeros for padding.
    lg = np.power(np.float64(gamma), np.arange(1, c + 1))
    lg = lg / lg.sum()
    w_img = np.tile(lg, b) / float(b * h * w)                         # (n_img,)
    w_img = np.concatenate(
        [w_img, np.zeros(n_pad_img - n_img)]).astype(np.float32)
    wgrid = w_img.reshape(groups_pad, tbc_w)
    wmap = np.kron(wgrid, np.ones((h, w), np.float32))                # (groups_pad*h, ccols)

    # pack x / y into lane-dense (groups_pad*H, tbc_w*W) slabs
    def pack(t):
        t = jnp.reshape(t.astype(jnp.float32), (n_img, h, w))
        if n_pad_img != n_img:
            t = jnp.pad(t, ((0, n_pad_img - n_img), (0, 0), (0, 0)))
        t = jnp.reshape(t, (groups_pad, tbc_w, h, w))
        t = jnp.transpose(t, (0, 2, 1, 3))
        return jnp.reshape(t, (groups_pad * h, ccols))

    xp = pack(x)
    yp = pack(y)

    kernel = functools.partial(
        _combined_loss_kernel,
        alpha=float(alpha), c1=0.01 ** 2, c2=0.03 ** 2, eps=1e-12,
        fuse_rows=fuse_rows)

    ah_n = ah.shape[0]
    partials = pl.pallas_call(
        kernel,
        out_shape=jax.ShapeDtypeStruct((n_tiles, 8, 128), jnp.float32),
        grid_spec=pltpu.PrefetchScalarGridSpec(
            num_scalar_prefetch=0,
            grid=(n_tiles,),
            in_specs=[
                pl.BlockSpec((rrows, ccols), lambda i: (i, 0)),     # x slab
                pl.BlockSpec((rrows, ccols), lambda i: (i, 0)),     # y slab
                pl.BlockSpec((rrows, ccols), lambda i: (i, 0)),     # weight map
                pl.BlockSpec((ah_n, ah_n), lambda i: (0, 0)),       # row filter
                pl.BlockSpec((ccols, ccols), lambda i: (0, 0)),     # col filter
            ],
            out_specs=pl.BlockSpec((1, 8, 128), lambda i: (i, 0, 0)),
        ),
        compiler_params=pltpu.CompilerParams(
            dimension_semantics=("parallel",)),
    )(xp, yp, jnp.asarray(wmap), jnp.asarray(ah), jnp.asarray(awt))

    # tiny final reduction over the per-step partial sums
    return jnp.sum(partials[:, 0, 0])


# ---------------------------------------------------------------------------
if __name__ == "__main__":
    key = jax.random.PRNGKey(0)
    kx, ky = jax.random.split(key)
    B, C, H, W = 2, 4, 16, 16
    x = jax.random.uniform(kx, (B, C, H, W), dtype=jnp.float32)
    y = jax.random.uniform(ky, (B, C, H, W), dtype=jnp.float32)

    loss = combined_loss_discounted(x, y, alpha=0.5, window_size=9, gamma=0.9)
    loss = jax.block_until_ready(loss)
    assert loss.shape == () and bool(jnp.isfinite(loss))
    print("KERNEL_OK")
</pallas_src>

<mosaic_0001>
module attributes {stable_mosaic.version = 11 : i64} {
  func.func @_combined_loss_kernel(%arg0: i32, %arg1: memref<16x128xf32, #tpu.memory_space<vmem>>, %arg2: memref<16x128xf32, #tpu.memory_space<vmem>>, %arg3: memref<16x128xf32, #tpu.memory_space<vmem>>, %arg4: memref<80x80xf32, #tpu.memory_space<vmem>>, %arg5: memref<128x128xf32, #tpu.memory_space<vmem>>, %arg6: memref<1x8x128xf32, #tpu.memory_space<vmem>>) attributes {dimension_semantics = [#tpu.dimension_semantics<parallel>], iteration_bounds = array<i64: 1>, scalar_prefetch = 0 : i64, scratch_operands = 0 : i64, tpu.core_type = #tpu.core_type<tc>, window_params = [{transform_indices = @transform_0, window_bounds = array<i64: 16, 128>}, {transform_indices = @transform_1, window_bounds = array<i64: 16, 128>}, {transform_indices = @transform_2, window_bounds = array<i64: 16, 128>}, {pipeline_mode = #tpu.pipeline_mode<synchronous>, transform_indices = @transform_3, window_bounds = array<i64: 80, 80>}, {pipeline_mode = #tpu.pipeline_mode<synchronous>, transform_indices = @transform_4, window_bounds = array<i64: 128, 128>}, {transform_indices = @transform_5, window_bounds = array<i64: 1, 8, 128>}]} {
    %c0 = arith.constant 0 : index
    %c0_0 = arith.constant 0 : index
    %0 = vector.load %arg1[%c0, %c0_0] : memref<16x128xf32, #tpu.memory_space<vmem>>, vector<16x128xf32>
    %c0_1 = arith.constant 0 : index
    %c0_2 = arith.constant 0 : index
    %1 = vector.load %arg2[%c0_1, %c0_2] : memref<16x128xf32, #tpu.memory_space<vmem>>, vector<16x128xf32>
    %c0_3 = arith.constant 0 : index
    %c0_4 = arith.constant 0 : index
    %2 = vector.load %arg3[%c0_3, %c0_4] : memref<16x128xf32, #tpu.memory_space<vmem>>, vector<16x128xf32>
    %c0_5 = arith.constant 0 : index
    %c0_6 = arith.constant 0 : index
    %3 = vector.load %arg4[%c0_5, %c0_6] : memref<80x80xf32, #tpu.memory_space<vmem>>, vector<80x80xf32>
    %c0_7 = arith.constant 0 : index
    %c0_8 = arith.constant 0 : index
    %4 = vector.load %arg5[%c0_7, %c0_8] : memref<128x128xf32, #tpu.memory_space<vmem>>, vector<128x128xf32>
    %5 = arith.mulf %0, %0 : vector<16x128xf32>
    %6 = arith.mulf %1, %1 : vector<16x128xf32>
    %7 = arith.mulf %0, %1 : vector<16x128xf32>
    %8 = tpu.concatenate %0, %1, %5, %6, %7 in 0 : vector<16x128xf32>, vector<16x128xf32>, vector<16x128xf32>, vector<16x128xf32>, vector<16x128xf32> -> vector<80x128xf32>
    %cst = arith.constant dense<0.000000e+00> : vector<80x128xf32>
    %9 = tpu.matmul %8, %4, %cst {dimension_numbers = #tpu.dot_dimension_numbers<[1], [0], [0], [1], [0, 0, 1, 1], [], []>} : vector<80x128xf32>, vector<128x128xf32>, vector<80x128xf32> -> vector<80x128xf32>
    %cst_9 = arith.constant dense<0.000000e+00> : vector<80x128xf32>
    %10 = tpu.matmul %3, %9, %cst_9 {dimension_numbers = #tpu.dot_dimension_numbers<[1], [0], [0], [1], [0, 0, 1, 1], [], []>} : vector<80x80xf32>, vector<80x128xf32>, vector<80x128xf32> -> vector<80x128xf32>
    %11 = vector.extract_strided_slice %10 {offsets = [0, 0], sizes = [16, 128], strides = [1, 1]} : vector<80x128xf32> to vector<16x128xf32>
    %12 = vector.extract_strided_slice %10 {offsets = [16, 0], sizes = [16, 128], strides = [1, 1]} : vector<80x128xf32> to vector<16x128xf32>
    %13 = vector.extract_strided_slice %10 {offsets = [32, 0], sizes = [16, 128], strides = [1, 1]} : vector<80x128xf32> to vector<16x128xf32>
    %14 = vector.extract_strided_slice %10 {offsets = [48, 0], sizes = [16, 128], strides = [1, 1]} : vector<80x128xf32> to vector<16x128xf32>
    %15 = vector.extract_strided_slice %10 {offsets = [64, 0], sizes = [16, 128], strides = [1, 1]} : vector<80x128xf32> to vector<16x128xf32>
    %16 = arith.mulf %11, %11 : vector<16x128xf32>
    %17 = arith.subf %13, %16 : vector<16x128xf32>
    %18 = arith.mulf %12, %12 : vector<16x128xf32>
    %19 = arith.subf %14, %18 : vector<16x128xf32>
    %20 = arith.mulf %11, %12 : vector<16x128xf32>
    %21 = arith.subf %15, %20 : vector<16x128xf32>
    %cst_10 = arith.constant 2.000000e+00 : f32
    %22 = vector.broadcast %cst_10 : f32 to vector<16x128xf32>
    %23 = arith.mulf %22, %11 : vector<16x128xf32>
    %24 = arith.mulf %23, %12 : vector<16x128xf32>
    %cst_11 = arith.constant 9.99999974E-5 : f32
    %25 = vector.broadcast %cst_11 : f32 to vector<16x128xf32>
    %26 = arith.addf %24, %25 : vector<16x128xf32>
    %cst_12 = arith.constant 2.000000e+00 : f32
    %27 = vector.broadcast %cst_12 : f32 to vector<16x128xf32>
    %28 = arith.mulf %27, %21 : vector<16x128xf32>
    %cst_13 = arith.constant 8.99999984E-4 : f32
    %29 = vector.broadcast %cst_13 : f32 to vector<16x128xf32>
    %30 = arith.addf %28, %29 : vector<16x128xf32>
    %31 = arith.mulf %26, %30 : vector<16x128xf32>
    %32 = arith.mulf %11, %11 : vector<16x128xf32>
    %33 = arith.mulf %12, %12 : vector<16x128xf32>
    %34 = arith.addf %32, %33 : vector<16x128xf32>
    %cst_14 = arith.constant 9.99999974E-5 : f32
    %35 = vector.broadcast %cst_14 : f32 to vector<16x128xf32>
    %36 = arith.addf %34, %35 : vector<16x128xf32>
    %37 = arith.addf %17, %19 : vector<16x128xf32>
    %cst_15 = arith.constant 8.99999984E-4 : f32
    %38 = vector.broadcast %cst_15 : f32 to vector<16x128xf32>
    %39 = arith.addf %37, %38 : vector<16x128xf32>
    %40 = arith.mulf %36, %39 : vector<16x128xf32>
    %cst_16 = arith.constant 9.99999996E-13 : f32
    %41 = vector.broadcast %cst_16 : f32 to vector<16x128xf32>
    %42 = arith.addf %40, %41 : vector<16x128xf32>
    %43 = arith.divf %31, %42 : vector<16x128xf32>
    %cst_17 = arith.constant 1.000000e+00 : f32
    %44 = vector.broadcast %cst_17 : f32 to vector<16x128xf32>
    %45 = arith.subf %44, %43 : vector<16x128xf32>
    %cst_18 = arith.constant 5.000000e-01 : f32
    %46 = vector.broadcast %cst_18 : f32 to vector<16x128xf32>
    %47 = arith.mulf %46, %45 : vector<16x128xf32>
    %cst_19 = arith.constant 0.000000e+00 : f32
    %cst_20 = arith.constant 1.000000e+00 : f32
    %48 = vector.broadcast %cst_19 : f32 to vector<16x128xf32>
    %49 = arith.maximumf %48, %47 : vector<16x128xf32>
    %50 = vector.broadcast %cst_20 : f32 to vector<16x128xf32>
    %51 = arith.minimumf %50, %49 : vector<16x128xf32>
    %52 = arith.subf %0, %1 : vector<16x128xf32>
    %53 = math.absf %52 : vector<16x128xf32>
    %cst_21 = arith.constant 5.000000e-01 : f32
    %54 = vector.broadcast %cst_21 : f32 to vector<16x128xf32>
    %55 = arith.mulf %54, %53 : vector<16x128xf32>
    %cst_22 = arith.constant 5.000000e-01 : f32
    %56 = vector.broadcast %cst_22 : f32 to vector<16x128xf32>
    %57 = arith.mulf %56, %51 : vector<16x128xf32>
    %58 = arith.addf %55, %57 : vector<16x128xf32>
    %59 = arith.mulf %58, %2 : vector<16x128xf32>
    %cst_23 = arith.constant dense<0.000000e+00> : vector<16xf32>
    %60 = vector.multi_reduction <add>, %59, %cst_23 [1] : vector<16x128xf32> to vector<16xf32>
    %61 = vector.shape_cast %60 : vector<16xf32> to vector<16x1xf32>
    %cst_24 = arith.constant dense<0.000000e+00> : vector<1xf32>
    %62 = vector.multi_reduction <add>, %61, %cst_24 [0] : vector<16x1xf32> to vector<1xf32>
    %63 = vector.shape_cast %62 : vector<1xf32> to vector<1x1xf32>
    %64 = vector.shape_cast %63 : vector<1x1xf32> to vector<1x1xf32>
    %65 = vector.broadcast %64 : vector<1x1xf32> to vector<8x128xf32>
    %c0_25 = arith.constant 0 : index
    %c0_26 = arith.constant 0 : index
    %c0_27 = arith.constant 0 : index
    %66 = vector.load %arg6[%c0_25, %c0_26, %c0_27] : memref<1x8x128xf32, #tpu.memory_space<vmem>>, vector<1x8x128xf32>
    %67 = vector.shape_cast %66 : vector<1x8x128xf32> to vector<8x128xf32>
    %68 = vector.shape_cast %65 : vector<8x128xf32> to vector<1x8x128xf32>
    tpu.vector_store %arg6[%c0_25, %c0_26, %c0_27], %68 {strides = array<i32>} : memref<1x8x128xf32, #tpu.memory_space<vmem>>, vector<1x8x128xf32>,
    return
  }
  func.func @transform_0(%arg0: i32) -> (i32, i32) {
    %c0_i32 = arith.constant 0 : i32
    %c0_i32_0 = arith.constant 0 : i32
    return %arg0, %c0_i32 : i32, i32
  }
  func.func @transform_1(%arg0: i32) -> (i32, i32) {
    %c0_i32 = arith.constant 0 : i32
    %c0_i32_0 = arith.constant 0 : i32
    return %arg0, %c0_i32 : i32, i32
  }
  func.func @transform_2(%arg0: i32) -> (i32, i32) {
    %c0_i32 = arith.constant 0 : i32
    %c0_i32_0 = arith.constant 0 : i32
    return %arg0, %c0_i32 : i32, i32
  }
  func.func @transform_3(%arg0: i32) -> (i32, i32) {
    %c0_i32 = arith.constant 0 : i32
    %c0_i32_0 = arith.constant 0 : i32
    %c0_i32_1 = arith.constant 0 : i32
    return %c0_i32, %c0_i32_0 : i32, i32
  }
  func.func @transform_4(%arg0: i32) -> (i32, i32) {
    %c0_i32 = arith.constant 0 : i32
    %c0_i32_0 = arith.constant 0 : i32
    %c0_i32_1 = arith.constant 0 : i32
    return %c0_i32, %c0_i32_0 : i32, i32
  }
  func.func @transform_5(%arg0: i32) -> (i32, i32, i32) {
    %c0_i32 = arith.constant 0 : i32
    %c0_i32_0 = arith.constant 0 : i32
    %c0_i32_1 = arith.constant 0 : i32
    return %arg0, %c0_i32, %c0_i32_0 : i32, i32, i32
  }
}

</mosaic_0001>

<llo_original>
// kernel: tpu_custom_call.1
$region0: #{tpu_custom_call.1}
  #allocation0 [shape = 'u32[]', space=smem, size = 0x4, offset = 0x4, fixed_abs, tag = 'smem constant byte address 0x4 - core index']
  #allocation1 [shape = 'u32[72,128]{1,0:T(1,128)}', space=vmem, size = 0x9000, scoped, tag = 'internal scratch']
  %s0 = inlined_call_operand.hbm [shape: f32[16,128], index: 0, kind: input, shape index: {}]
  %s1 = inlined_call_operand.hbm [shape: f32[16,128], index: 1, kind: input, shape index: {}]
  %s2 = inlined_call_operand.hbm [shape: f32[16,128], index: 2, kind: input, shape index: {}]
  %s3 = inlined_call_operand.hbm [shape: f32[80,80], index: 3, kind: input, shape index: {}]
  %s4 = inlined_call_operand.hbm [shape: f32[128,128], index: 4, kind: input, shape index: {}]
  %s5 = inlined_call_operand.hbm [shape: f32[1,8,128], index: 5, kind: output, shape index: {}]
  %s6 = sld [smem:[#allocation0]]
  $region50: #{tpu_custom_call.1} parent=0
    _
  %s8 = ssub.s32 1, %s6
  %s9 = scalar_select 0, %s8, %s6
  $region1: #{tpu_custom_call.1} parent=0
    #allocation2 [shape = 'u8[8192]{0}', space=vmem, size = 0x2000, scoped, tag = 'input window, operand 0, single buffered']
    #allocation3 [shape = 's32[1]{0}', space=sflag, size = 0x4, scoped, tag = 'scoped memory for tpu_custom_call.1']
    #allocation4 [shape = 's32[1]{0}', space=sflag, size = 0x4, scoped, tag = 'scoped memory for tpu_custom_call.1']
    #allocation5 [shape = 'u8[8192]{0}', space=vmem, size = 0x2000, scoped, tag = 'input window, operand 1, single buffered']
    #allocation6 [shape = 's32[1]{0}', space=sflag, size = 0x4, scoped, tag = 'scoped memory for tpu_custom_call.1']
    #allocation7 [shape = 'u8[8192]{0}', space=vmem, size = 0x2000, scoped, tag = 'input window, operand 2, single buffered']
    #allocation8 [shape = 'u8[40960]{0}', space=vmem, size = 0xa000, scoped, tag = 'input window, operand 3, single buffered']
    #allocation9 [shape = 's32[1]{0}', space=sflag, size = 0x4, scoped, tag = 'scoped memory for tpu_custom_call.1']
    #allocation10 [shape = 'u8[65536]{0}', space=vmem, size = 0x10000, scoped, tag = 'input window, operand 4, single buffered']
    #allocation11 [shape = 'u8[4096]{0}', space=vmem, size = 0x1000, scoped, tag = 'output window, operand 0, single buffered']
    %10 = vsyncpa [#allocation3], 0
    %11 = vsyncpa [#allocation6], 0
    %12 = vsyncpa [#allocation9], 0
    %13 = vsyncpa [#allocation4], 0
    // Predicated region
    $region2: #{tpu_custom_call.1} parent=1 // pred_check
      _
    $region3: #{tpu_custom_call.1} parent=1 // pred_check_branch
      %15 = sbr.rel (0) target = $region5
    $region4: #{tpu_custom_call.1} parent=1 // pred_region
      %17 = vsyncadd [#allocation3], 0
      %s18 = sshll.u32 %s0, 4
      %s19 = int_to_ptr.hbm [resolvable:$true] %s18
      %s20 = sshll.u32 [#allocation2], 4
      %s21 = int_to_ptr.vmem [resolvable:$true] %s20
      %26 = dma.hbm_to_vmem [thread:$0]  %s19, 256, %s21, [#allocation3], 128, 128, 8
    $region5: #{tpu_custom_call.1} parent=1 // pred_fallthru
      _
    // Predicated region
    $region6: #{tpu_custom_call.1} parent=1 // pred_check
      _
    $region7: #{tpu_custom_call.1} parent=1 // pred_check_branch
      %28 = sbr.rel (0) target = $region9
    $region8: #{tpu_custom_call.1} parent=1 // pred_region
      %30 = vsyncadd [#allocation6], 0
      %s31 = sshll.u32 %s1, 4
      %s32 = int_to_ptr.hbm [resolvable:$true] %s31
      %s33 = sshll.u32 [#allocation5], 4
      %s34 = int_to_ptr.vmem [resolvable:$true] %s33
      %39 = dma.hbm_to_vmem [thread:$0]  %s32, 256, %s34, [#allocation6], 128, 128, 8
    $region9: #{tpu_custom_call.1} parent=1 // pred_fallthru
      _
    // Predicated region
    $region10: #{tpu_custom_call.1} parent=1 // pred_check
      _
    $region11: #{tpu_custom_call.1} parent=1 // pred_check_branch
      %41 = sbr.rel (0) target = $region13
    $region12: #{tpu_custom_call.1} parent=1 // pred_region
      %43 = vsyncadd [#allocation6], 0
      %s44 = sshll.u32 %s2, 4
      %s45 = int_to_ptr.hbm [resolvable:$true] %s44
      %s46 = sshll.u32 [#allocation7], 4
      %s47 = int_to_ptr.vmem [resolvable:$true] %s46
      %52 = dma.hbm_to_vmem [thread:$0]  %s45, 256, %s47, [#allocation6], 128, 128, 8
    $region13: #{tpu_custom_call.1} parent=1 // pred_fallthru
      _
    // Predicated region
    $region14: #{tpu_custom_call.1} parent=1 // pred_check
      _
    $region15: #{tpu_custom_call.1} parent=1 // pred_check_branch
      %54 = sbr.rel (0) target = $region17
    $region16: #{tpu_custom_call.1} parent=1 // pred_region
      %56 = vsyncadd [#allocation9], 0
      %s57 = sshll.u32 %s3, 4
      %s58 = int_to_ptr.hbm [resolvable:$true] %s57
      %s59 = sshll.u32 [#allocation8], 4
      %s60 = int_to_ptr.vmem [resolvable:$true] %s59
      %65 = dma.hbm_to_vmem [thread:$0]  %s58, 1280, %s60, [#allocation9], 128, 128, 8
    $region17: #{tpu_custom_call.1} parent=1 // pred_fallthru
      _
    // Predicated region
    $region18: #{tpu_custom_call.1} parent=1 // pred_check
      _
    $region19: #{tpu_custom_call.1} parent=1 // pred_check_branch
      %67 = sbr.rel (0) target = $region21
    $region20: #{tpu_custom_call.1} parent=1 // pred_region
      %69 = vsyncadd [#allocation9], 0
      %s70 = sshll.u32 %s4, 4
      %s71 = int_to_ptr.hbm [resolvable:$true] %s70
      %s72 = sshll.u32 [#allocation10], 4
      %s73 = int_to_ptr.vmem [resolvable:$true] %s72
      %78 = dma.hbm_to_vmem [thread:$0]  %s71, 2048, %s73, [#allocation9], 128, 128, 8
    $region21: #{tpu_custom_call.1} parent=1 // pred_fallthru
      _
    // Predicated region
    $region22: #{tpu_custom_call.1} parent=1 // pred_check
      _
    $region23: #{tpu_custom_call.1} parent=1 // pred_check_branch
      %80 = sbr.rel (0) target = $region25
    $region24: #{tpu_custom_call.1} parent=1 // pred_region
      %82 = dma.done [#allocation3], 256
    $region25: #{tpu_custom_call.1} parent=1 // pred_fallthru
      _
    // Predicated region
    $region26: #{tpu_custom_call.1} parent=1 // pred_check
      _
    $region27: #{tpu_custom_call.1} parent=1 // pred_check_branch
      %84 = sbr.rel (0) target = $region29
    $region28: #{tpu_custom_call.1} parent=1 // pred_region
      %86 = dma.done [#allocation6], 256
    $region29: #{tpu_custom_call.1} parent=1 // pred_fallthru
      _
    // Predicated region
    $region30: #{tpu_custom_call.1} parent=1 // pred_check
      _
    $region31: #{tpu_custom_call.1} parent=1 // pred_check_branch
      %88 = sbr.rel (0) target = $region33
    $region32: #{tpu_custom_call.1} parent=1 // pred_region
      %90 = dma.done [#allocation6], 256
    $region33: #{tpu_custom_call.1} parent=1 // pred_fallthru
      _
    // Predicated region
    $region34: #{tpu_custom_call.1} parent=1 // pred_check
      _
    $region35: #{tpu_custom_call.1} parent=1 // pred_check_branch
      %92 = sbr.rel (0) target = $region37
    $region36: #{tpu_custom_call.1} parent=1 // pred_region
      %94 = dma.done [#allocation9], 1280
    $region37: #{tpu_custom_call.1} parent=1 // pred_fallthru
      _
    // Predicated region
    $region38: #{tpu_custom_call.1} parent=1 // pred_check
      _
    $region39: #{tpu_custom_call.1} parent=1 // pred_check_branch
      %96 = sbr.rel (0) target = $region41
    $region40: #{tpu_custom_call.1} parent=1 // pred_region
      %98 = dma.done [#allocation9], 2048
    $region41: #{tpu_custom_call.1} parent=1 // pred_fallthru
      _
    %v99 = vld [vmem:[#allocation2] sm:$0xff]
    %v100 = vld [vmem:[#allocation2 + $0x8] sm:$0xff]
    %v101 = vld [vmem:[#allocation5] sm:$0xff]
    %v102 = vld [vmem:[#allocation5 + $0x8] sm:$0xff]
    %v103 = vld [vmem:[#allocation7] sm:$0xff]
    %v104 = vld [vmem:[#allocation7 + $0x8] sm:$0xff]
    %v105 = vld [vmem:[#allocation8] sm:$0xff]
    %v106 = vld [vmem:[#allocation8 + $0x8] sm:$0xff]
    %v107 = vld [vmem:[#allocation8 + $0x10] sm:$0xff]
    %v108 = vld [vmem:[#allocation8 + $0x18] sm:$0xff]
    %v109 = vld [vmem:[#allocation8 + $0x20] sm:$0xff]
    %v110 = vld [vmem:[#allocation8 + $0x28] sm:$0xff]
    %v111 = vld [vmem:[#allocation8 + $0x30] sm:$0xff]
    %v112 = vld [vmem:[#allocation8 + $0x38] sm:$0xff]
    %v113 = vld [vmem:[#allocation8 + $0x40] sm:$0xff]
    %v114 = vld [vmem:[#allocation8 + $0x48] sm:$0xff]
    %v115 = vld [vmem:[#allocation10] sm:$0xff]
    %v116 = vld [vmem:[#allocation10 + $0x8] sm:$0xff]
    %v117 = vld [vmem:[#allocation10 + $0x10] sm:$0xff]
    %v118 = vld [vmem:[#allocation10 + $0x18] sm:$0xff]
    %v119 = vld [vmem:[#allocation10 + $0x20] sm:$0xff]
    %v120 = vld [vmem:[#allocation10 + $0x28] sm:$0xff]
    %v121 = vld [vmem:[#allocation10 + $0x30] sm:$0xff]
    %v122 = vld [vmem:[#allocation10 + $0x38] sm:$0xff]
    %v123 = vld [vmem:[#allocation10 + $0x40] sm:$0xff]
    %v124 = vld [vmem:[#allocation10 + $0x48] sm:$0xff]
    %v125 = vld [vmem:[#allocation10 + $0x50] sm:$0xff]
    %v126 = vld [vmem:[#allocation10 + $0x58] sm:$0xff]
    %v127 = vld [vmem:[#allocation10 + $0x60] sm:$0xff]
    %v128 = vld [vmem:[#allocation10 + $0x68] sm:$0xff]
    %v129 = vld [vmem:[#allocation10 + $0x70] sm:$0xff]
    %v130 = vld [vmem:[#allocation10 + $0x78] sm:$0xff]
    %v131 = vmul.f32 %v99, %v99
    %v132 = vmul.f32 %v100, %v100
    %v133 = vmul.f32 %v101, %v101
    %v134 = vmul.f32 %v102, %v102
    %v135 = vmul.f32 %v99, %v101
    %v136 = vmul.f32 %v100, %v102
    %137 = vmatpush.msra.mxu0 %v130
    %138 = vmatpush.msra.mxu0 %v129
    %139 = vmatpush.msra.mxu0 %v128
    %140 = vmatpush.msra.mxu0 %v127
    %141 = vmatpush.msra.mxu0 %v126
    %142 = vmatpush.msra.mxu0 %v125
    %143 = vmatpush.msra.mxu0 %v124
    %144 = vmatpush.msra.mxu0 %v123
    %145 = vmatpush.msra.mxu0 %v122
    %146 = vmatpush.msra.mxu0 %v121
    %147 = vmatpush.msra.mxu0 %v120
    %148 = vmatpush.msra.mxu0 %v119
    %149 = vmatpush.msra.mxu0 %v118
    %150 = vmatpush.msra.mxu0 %v117
    %151 = vmatpush.msra.mxu0 %v116
    %152 = vmatpush.msra.mxu0 %v115
    %153 = vmatmul.f32.gmra.mxu0 %v99
    %v154 = vpop.f32.mrf.mxu0
    %v155 = vadd.f32 0.0, %v154
    %156 = vmatmul.f32.gmra.mxu0 %v100
    %v157 = vpop.f32.mrf.mxu0
    %v158 = vadd.f32 0.0, %v157
    %159 = vmatmul.f32.gmra.mxu0 %v101
    %v160 = vpop.f32.mrf.mxu0
    %v161 = vadd.f32 0.0, %v160
    %162 = vmatmul.f32.gmra.mxu0 %v102
    %v163 = vpop.f32.mrf.mxu0
    %v164 = vadd.f32 0.0, %v163
    %165 = vmatmul.f32.gmra.mxu0 %v131
    %v166 = vpop.f32.mrf.mxu0
    %v167 = vadd.f32 0.0, %v166
    %168 = vmatmul.f32.gmra.mxu0 %v132
    %v169 = vpop.f32.mrf.mxu0
    %v170 = vadd.f32 0.0, %v169
    %171 = vmatmul.f32.gmra.mxu0 %v133
    %v172 = vpop.f32.mrf.mxu0
    %v173 = vadd.f32 0.0, %v172
    %174 = vmatmul.f32.gmra.mxu0 %v134
    %v175 = vpop.f32.mrf.mxu0
    %v176 = vadd.f32 0.0, %v175
    %177 = vmatmul.f32.gmra.mxu0 %v135
    %v178 = vpop.f32.mrf.mxu0
    %v179 = vadd.f32 0.0, %v178
    %180 = vmatmul.f32.gmra.mxu0 %v136
    %v181 = vpop.f32.mrf.mxu0
    %v182 = vadd.f32 0.0, %v181
    %183 = vdwg.mxu0
    %vm184 = vcmask 654336
    %v186 = vsel %vm184, %v105, 0
    %v189 = vsel %vm184, %v106, 0
    %v192 = vsel %vm184, %v107, 0
    %v195 = vsel %vm184, %v108, 0
    %v198 = vsel %vm184, %v109, 0
    %v201 = vsel %vm184, %v110, 0
    %v204 = vsel %vm184, %v111, 0
    %v207 = vsel %vm184, %v112, 0
    %v210 = vsel %vm184, %v113, 0
    %v213 = vsel %vm184, %v114, 0
    %215 = vmatpush.msra.mxu0 0.0
    %216 = vmatpush.msra.mxu0 0.0
    %217 = vmatpush.msra.mxu0 0.0
    %218 = vmatpush.msra.mxu0 0.0
    %219 = vmatpush.msra.mxu0 0.0
    %220 = vmatpush.msra.mxu0 0.0
    %221 = vmatpush.msra.mxu0 %v182
    %222 = vmatpush.msra.mxu0 %v179
    %223 = vmatpush.msra.mxu0 %v176
    %224 = vmatpush.msra.mxu0 %v173
    %225 = vmatpush.msra.mxu0 %v170
    %226 = vmatpush.msra.mxu0 %v167
    %227 = vmatpush.msra.mxu0 %v164
    %228 = vmatpush.msra.mxu0 %v161
    %229 = vmatpush.msra.mxu0 %v158
    %230 = vmatpush.msra.mxu0 %v155
    %231 = vmatmul.f32.gmra.mxu0 %v186
    %v232 = vpop.f32.mrf.mxu0
    %v233 = vadd.f32 0.0, %v232
    %234 = vmatmul.f32.gmra.mxu0 %v189
    %v235 = vpop.f32.mrf.mxu0
    %v236 = vadd.f32 0.0, %v235
    %237 = vmatmul.f32.gmra.mxu0 %v192
    %v238 = vpop.f32.mrf.mxu0
    %v239 = vadd.f32 0.0, %v238
    %240 = vmatmul.f32.gmra.mxu0 %v195
    %v241 = vpop.f32.mrf.mxu0
    %v242 = vadd.f32 0.0, %v241
    %243 = vmatmul.f32.gmra.mxu0 %v198
    %v244 = vpop.f32.mrf.mxu0
    %v245 = vadd.f32 0.0, %v244
    %246 = vmatmul.f32.gmra.mxu0 %v201
    %v247 = vpop.f32.mrf.mxu0
    %v248 = vadd.f32 0.0, %v247
    %249 = vmatmul.f32.gmra.mxu0 %v204
    %v250 = vpop.f32.mrf.mxu0
    %v251 = vadd.f32 0.0, %v250
    %252 = vmatmul.f32.gmra.mxu0 %v207
    %v253 = vpop.f32.mrf.mxu0
    %v254 = vadd.f32 0.0, %v253
    %255 = vmatmul.f32.gmra.mxu0 %v210
    %v256 = vpop.f32.mrf.mxu0
    %v257 = vadd.f32 0.0, %v256
    %258 = vmatmul.f32.gmra.mxu0 %v213
    %v259 = vpop.f32.mrf.mxu0
    %v260 = vadd.f32 0.0, %v259
    %261 = vdwg.mxu0
    %v262 = vmul.f32 %v233, %v233
    %v263 = vmul.f32 %v236, %v236
    %v264 = vsub.f32 %v245, %v262
    %v265 = vsub.f32 %v248, %v263
    %v266 = vmul.f32 %v239, %v239
    %v267 = vmul.f32 %v242, %v242
    %v268 = vsub.f32 %v251, %v266
    %v269 = vsub.f32 %v254, %v267
    %v270 = vmul.f32 %v233, %v239
    %v271 = vmul.f32 %v236, %v242
    %v272 = vsub.f32 %v257, %v270
    %v273 = vsub.f32 %v260, %v271
    %v274 = vmul.f32 %v233, 2.0
    %v275 = vmul.f32 %v236, 2.0
    %v276 = vmul.f32 %v274, %v239
    %v277 = vmul.f32 %v275, %v242
    %v278 = vadd.f32 %v276, 0.0001
    %v279 = vadd.f32 %v277, 0.0001
    %v280 = vmul.f32 %v272, 2.0
    %v281 = vmul.f32 %v273, 2.0
    %v282 = vadd.f32 %v280, 0.0009
    %v283 = vadd.f32 %v281, 0.0009
    %v284 = vmul.f32 %v278, %v282
    %v285 = vmul.f32 %v279, %v283
    %v286 = vadd.f32 %v262, %v266
    %v287 = vadd.f32 %v263, %v267
    %v288 = vadd.f32 %v286, 0.0001
    %v289 = vadd.f32 %v287, 0.0001
    %v290 = vadd.f32 %v264, %v268
    %v291 = vadd.f32 %v265, %v269
    %v292 = vadd.f32 %v290, 0.0009
    %v293 = vadd.f32 %v291, 0.0009
    %v294 = vmul.f32 %v288, %v292
    %v295 = vmul.f32 %v289, %v293
    %v296 = vadd.f32 %v294, 1e-12
    %v297 = vadd.f32 %v295, 1e-12
    %v298 = vrcp.pop %v296
    %v299 = vmul.f32 %v296, %v298
    %v300 = vsub.f32 1.0, %v299
    %v301 = vmul.f32 %v298, %v300
    %v302 = vadd.f32 %v298, %v301
    %vm303 = vweird.f32 %v296
    %vm304 = vweird.f32 %v298
    %vm305 = vmor %vm303, %vm304
    %v306 = vsel %vm305, %v298, %v302
    %v307 = vand.u32 2147483647, %v296
    %vm308 = vcmp.eq.f32.partialorder %v307, 8.507059e+37
    %v309 = vand.u32 %v296, 2147483648
    %v310 = vor.u32 1.1754944e-38, %v309
    %v311 = vsel %vm308, %v310, %v306
    %v312 = vmul.f32 %v284, %v311
    %v313 = vrcp.pop %v297
    %v314 = vmul.f32 %v297, %v313
    %v315 = vsub.f32 1.0, %v314
    %v316 = vmul.f32 %v313, %v315
    %v317 = vadd.f32 %v313, %v316
    %vm318 = vweird.f32 %v297
    %vm319 = vweird.f32 %v313
    %vm320 = vmor %vm318, %vm319
    %v321 = vsel %vm320, %v313, %v317
    %v322 = vand.u32 2147483647, %v297
    %vm323 = vcmp.eq.f32.partialorder %v322, 8.507059e+37
    %v324 = vand.u32 %v297, 2147483648
    %v325 = vor.u32 1.1754944e-38, %v324
    %v326 = vsel %vm323, %v325, %v321
    %v327 = vmul.f32 %v285, %v326
    %v328 = vsub.f32 1.0, %v312
    %v329 = vsub.f32 1.0, %v327
    %v330 = vmul.f32 %v328, 0.5
    %v331 = vmul.f32 %v329, 0.5
    %v332 = vmax.f32 %v330, 0.0
    %v333 = vmax.f32 %v331, 0.0
    %v334 = vmin.f32 %v332, 1.0
    %v335 = vmin.f32 %v333, 1.0
    %v336 = vsub.f32 %v99, %v101
    %v337 = vsub.f32 %v100, %v102
    %v338 = vand.u32 2147483647, %v336
    %v339 = vand.u32 2147483647, %v337
    %v340 = vmul.f32 %v338, 0.5
    %v341 = vmul.f32 %v339, 0.5
    %v342 = vmul.f32 %v334, 0.5
    %v343 = vmul.f32 %v335, 0.5
    %v344 = vadd.f32 %v340, %v342
    %v345 = vadd.f32 %v341, %v343
    %v346 = vmul.f32 %v344, %v103
    %v347 = vmul.f32 %v345, %v104
    %348 = vadd.xlane.f32.xlu0 %v346
    %v349 = vpop.xlane.xlu0 %348
    %350 = vadd.xlane.f32.xlu0 %v347
    %v351 = vpop.xlane.xlu0 %350
    %v352 = vadd.f32 %v349, %v351
    %v353 = vrot.slane %v352, 4
    %v354 = vadd.f32 %v352, %v353
    %v355 = vrot.slane %v354, 2
    %v356 = vadd.f32 %v354, %v355
    %v357 = vrot.slane %v356, 1
    %v358 = vadd.f32 %v356, %v357
    %359 = vst [vmem:[#allocation11] sm:$0xff] %v358
    // Predicated region
    $region42: #{tpu_custom_call.1} parent=1 // pred_check
      _
    $region43: #{tpu_custom_call.1} parent=1 // pred_check_branch
      %361 = sbr.rel (0) target = $region45
    $region44: #{tpu_custom_call.1} parent=1 // pred_region
      %363 = vsyncadd [#allocation4], 0
      %s365 = sshll.u32 [#allocation11], 4
      %s366 = int_to_ptr.vmem [resolvable:$true] %s365
      %s367 = sshll.u32 %s5, 4
      %s368 = int_to_ptr.hbm [resolvable:$true] %s367
      %370 = dma.vmem_to_hbm [thread:$0]  %s366, 128, %s368, [#allocation4]
    $region45: #{tpu_custom_call.1} parent=1 // pred_fallthru
      _
    // Predicated region
    $region46: #{tpu_custom_call.1} parent=1 // pred_check
      _
    $region47: #{tpu_custom_call.1} parent=1 // pred_check_branch
      %372 = sbr.rel (0) target = $region49
    $region48: #{tpu_custom_call.1} parent=1 // pred_region
      %374 = dma.done [#allocation4], 128
    $region49: #{tpu_custom_call.1} parent=1 // pred_fallthru
      _
    %375 = vsyncpa [#allocation3], 1
    %376 = vsyncpa [#allocation6], 1
    %377 = vsyncpa [#allocation9], 1
    %378 = vsyncpa [#allocation4], 1

</llo_original>
